<compile_context>
chip_gen: v5e
topology: v5e:2x2
jax: 0.10.0
libtpu: 0.0.40
codegen_flags: <defaults>
</compile_context>

<pallas_src>
import jax
import jax.numpy as jnp
from jax.experimental import pallas as pl
from jax.experimental.pallas import tpu as pltpu


def _make_bmm_kernel(compute_dtype):
    def kernel(a_ref, f_ref, o_ref, acc_ref):
        # a_ref: (Bb, tm, tk), f_ref: (Bb, tk, tn), o_ref/acc_ref: (Bb, tm, tn)
        @pl.when(pl.program_id(3) == 0)
        def _init():
            acc_ref[...] = jnp.zeros_like(acc_ref)

        a = a_ref[...]
        f = f_ref[...]
        if compute_dtype is not None:
            # In-kernel cast (per tile) -- avoids a separate HBM cast pass.
            a = a.astype(compute_dtype)
            f = f.astype(compute_dtype)
        acc_ref[...] += jnp.einsum(
            "bij,bjd->bid", a, f, preferred_element_type=jnp.float32)

        @pl.when(pl.program_id(3) == pl.num_programs(3) - 1)
        def _finalize():
            o_ref[...] = acc_ref[...].astype(o_ref.dtype)

    return kernel


def _round_up(x, m):
    return -(-x // m) * m


def mean_aggregator(features, A, *, compute_dtype=None, _force_tiles=None):
    """Equivalent of MeanAggregator.forward: returns bmm(A, features).

    compute_dtype=None keeps PyTorch's f32 numerics (no cast anywhere);
    compute_dtype=jnp.bfloat16 casts tiles inside the kernel (f32 accumulate).
    _force_tiles=(tm, tk, tn) is a test hook to exercise the padded/tiled path
    at small sizes (tiles must be multiples of 128).
    """
    B, N, D = features.shape
    assert A.shape == (B, N, N), f"A must be (B,N,N), got {A.shape}"
    out_dtype = features.dtype
    a_bytes = jnp.dtype(A.dtype).itemsize
    f_bytes = jnp.dtype(features.dtype).itemsize
    o_bytes = jnp.dtype(out_dtype).itemsize

    # ---- Generation-aware VMEM budget (~75% of physical). -------------------
    # v7x: 64 MiB -> ~48 MiB; v5e/v6e: 128 MiB -> ~96 MiB.  Conservative
    # fallback is the v7x value.
    try:
        vmem_cap = int(getattr(pltpu.get_tpu_info(), "vmem_capacity_bytes",
                               64 * 1024 * 1024))
    except Exception:  # not on TPU / API unavailable
        vmem_cap = 64 * 1024 * 1024
    vmem_limit = min(int(0.75 * vmem_cap), 100 * 1024 * 1024)
    step_budget = int(0.85 * vmem_limit)

    def working_set(bb, tm, tk, tn):
        # Double-buffered inputs + double-buffered output + f32 accumulator.
        return bb * (2 * tm * tk * a_bytes + 2 * tk * tn * f_bytes
                     + 2 * tm * tn * o_bytes + tm * tn * 4)

    # ---- Tile selection. -----------------------------------------------------
    if _force_tiles is None and working_set(1, N, N, D) <= step_budget:
        # Small-problem path: one full-dim block per batch slab.  Block dims
        # equal the full array dims, so the (8,128) constraint doesn't apply
        # and no padding pass is needed.
        Np, Dp = N, D
        tm, tk, tn = N, N, D
        A_p, F_p = A, features
    else:
        # Tiled path: pad node/feature dims to 128 multiples so every block is
        # (8,128)-aligned and output stores are lane-dense (unmasked vst).
        Np = _round_up(N, 128)
        Dp = _round_up(D, 128)
        if _force_tiles is not None:
            tm, tk, tn = _force_tiles
        else:
            # 256 matches v6e/v7x's 256-wide MXU; 128 otherwise (also the
            # better choice on v5e's 4x128^2 MXU).
            tm = tk = 256 if Np % 256 == 0 else 128
            # Prefer tn == full Dp so the dominant A stream is read once
            # (collapses the j grid axis); otherwise the largest 128-multiple
            # divisor of Dp that fits the per-step budget.
            q = Dp // 128
            tn = 128
            for d in range(q, 0, -1):
                if q % d == 0 and working_set(1, tm, tk, d * 128) <= step_budget:
                    tn = d * 128
                    break
        Np = _round_up(Np, max(tm, tk))
        Dp = _round_up(Dp, tn)
        # Zero padding keeps the math exact (padded rows/cols contribute 0);
        # it costs one extra HBM pass but keeps blocks bounded for any N.
        A_p = jnp.pad(A, ((0, 0), (0, Np - N), (0, Np - N))) if Np != N else A
        F_p = (jnp.pad(features, ((0, 0), (0, Np - N), (0, Dp - D)))
               if (Np != N or Dp != D) else features)

    # ---- Batch blocking: largest divisor of B fitting the per-step budget. ---
    Bb = 1
    for cand in range(1, B + 1):
        if B % cand == 0 and working_set(cand, tm, tk, tn) <= step_budget:
            Bb = cand
    # Keep at least 2 steps on a parallel axis when possible so v7x's two
    # TensorCores can both be used (free on v5e/v6e).
    if B > 1 and Bb == B and (Np // tm) * (Dp // tn) == 1:
        for cand in range(B // 2, 0, -1):
            if B % cand == 0:
                Bb = cand
                break

    grid = (B // Bb, Np // tm, Dp // tn, Np // tk)

    cost = pl.CostEstimate(
        flops=int(2 * B * Np * Np * Dp),
        transcendentals=0,
        bytes_accessed=int(
            B * Np * Np * a_bytes * (Dp // tn)      # A, re-read per j step
            + B * Np * Dp * f_bytes * (Np // tm)    # features, re-read per i step
            + B * Np * Dp * o_bytes),               # output
    )

    out_padded = pl.pallas_call(
        _make_bmm_kernel(compute_dtype),
        out_shape=jax.ShapeDtypeStruct((B, Np, Dp), out_dtype),
        grid_spec=pltpu.PrefetchScalarGridSpec(
            num_scalar_prefetch=0,
            grid=grid,
            in_specs=[
                pl.BlockSpec((Bb, tm, tk), lambda b, i, j, k: (b, i, k)),  # A
                pl.BlockSpec((Bb, tk, tn), lambda b, i, j, k: (b, k, j)),  # feats
            ],
            out_specs=pl.BlockSpec((Bb, tm, tn), lambda b, i, j, k: (b, i, j)),
            scratch_shapes=[pltpu.VMEM((Bb, tm, tn), jnp.float32)],
        ),
        compiler_params=pltpu.CompilerParams(
            dimension_semantics=("parallel", "parallel", "parallel", "arbitrary"),
            vmem_limit_bytes=int(vmem_limit),
        ),
        cost_estimate=cost,
    )(A_p, F_p)

    if (Np, Dp) != (N, D):
        return out_padded[:, :N, :D]
    return out_padded


if __name__ == "__main__":
    # Small shapes consistent with the module: batch=2, nodes=8, hidden=32.
    B, N, D = 2, 8, 32
    k_feat, k_adj = jax.random.split(jax.random.PRNGKey(0))

    features = jax.random.normal(k_feat, (B, N, D), dtype=jnp.float32)
    adj = jax.random.uniform(k_adj, (B, N, N), dtype=jnp.float32)
    A = adj / jnp.sum(adj, axis=-1, keepdims=True)   # row-normalized ("mean") adjacency

    out = jax.block_until_ready(mean_aggregator(features, A))
    ref = jnp.einsum("bij,bjd->bid", A, features)
    assert out.shape == (B, N, D)
    assert out.dtype == features.dtype
    assert jnp.allclose(out, ref, atol=2e-3, rtol=2e-3)

    # Also exercise the padded, multi-tile path (K-axis accumulator, padding
    # correctness, lane-dense padded output) at a small non-aligned size.
    B2, N2, D2 = 2, 200, 160
    kf2, ka2 = jax.random.split(jax.random.PRNGKey(1))
    f2 = jax.random.normal(kf2, (B2, N2, D2), dtype=jnp.float32)
    a2 = jax.random.uniform(ka2, (B2, N2, N2), dtype=jnp.float32)
    a2 = a2 / jnp.sum(a2, axis=-1, keepdims=True)
    out2 = jax.block_until_ready(
        mean_aggregator(f2, a2, _force_tiles=(128, 128, 128)))
    ref2 = jnp.einsum("bij,bjd->bid", a2, f2)
    assert out2.shape == (B2, N2, D2)
    assert jnp.allclose(out2, ref2, atol=2e-3, rtol=2e-3)

    print("KERNEL_OK")
</pallas_src>

<mosaic_0001>
module attributes {stable_mosaic.version = 11 : i64} {
  func.func @kernel(%arg0: i32, %arg1: i32, %arg2: i32, %arg3: i32, %arg4: memref<1x8x8xf32, #tpu.memory_space<vmem>>, %arg5: memref<1x8x32xf32, #tpu.memory_space<vmem>>, %arg6: memref<1x8x32xf32, #tpu.memory_space<vmem>>, %arg7: memref<1x8x32xf32, #tpu.memory_space<vmem>>) attributes {dimension_semantics = [#tpu.dimension_semantics<parallel>, #tpu.dimension_semantics<parallel>, #tpu.dimension_semantics<parallel>, #tpu.dimension_semantics<arbitrary>], iteration_bounds = array<i64: 2, 1, 1, 1>, scalar_prefetch = 0 : i64, scratch_operands = 1 : i64, tpu.core_type = #tpu.core_type<tc>, window_params = [{transform_indices = @transform_0, window_bounds = array<i64: 1, 8, 8>}, {transform_indices = @transform_1, window_bounds = array<i64: 1, 8, 32>}, {transform_indices = @transform_2, window_bounds = array<i64: 1, 8, 32>}]} {
    %c0_i32 = arith.constant 0 : i32
    %0 = arith.cmpi eq, %arg3, %c0_i32 : i32
    %1 = arith.extui %0 : i1 to i32
    %c0_i32_0 = arith.constant 0 : i32
    %2 = arith.cmpi ne, %1, %c0_i32_0 : i32
    scf.if %2 {
      %cst_14 = arith.constant 0.000000e+00 : f32
      %12 = vector.broadcast %cst_14 : f32 to vector<1x8x32xf32>
      %c0_15 = arith.constant 0 : index
      %c0_16 = arith.constant 0 : index
      %c0_17 = arith.constant 0 : index
      %13 = vector.load %arg7[%c0_15, %c0_16, %c0_17] : memref<1x8x32xf32, #tpu.memory_space<vmem>>, vector<1x8x32xf32>
      tpu.vector_store %arg7[%c0_15, %c0_16, %c0_17], %12 {strides = array<i32>} : memref<1x8x32xf32, #tpu.memory_space<vmem>>, vector<1x8x32xf32>,
    } else {
    }
    %c0 = arith.constant 0 : index
    %c0_1 = arith.constant 0 : index
    %c0_2 = arith.constant 0 : index
    %3 = vector.load %arg4[%c0, %c0_1, %c0_2] : memref<1x8x8xf32, #tpu.memory_space<vmem>>, vector<1x8x8xf32>
    %c0_3 = arith.constant 0 : index
    %c0_4 = arith.constant 0 : index
    %c0_5 = arith.constant 0 : index
    %4 = vector.load %arg5[%c0_3, %c0_4, %c0_5] : memref<1x8x32xf32, #tpu.memory_space<vmem>>, vector<1x8x32xf32>
    %c0_6 = arith.constant 0 : index
    %c0_7 = arith.constant 0 : index
    %c0_8 = arith.constant 0 : index
    %5 = vector.load %arg7[%c0_6, %c0_7, %c0_8] : memref<1x8x32xf32, #tpu.memory_space<vmem>>, vector<1x8x32xf32>
    "tpu.trace_start"() <{level = 10 : i32, message = "bij,bjd->bid"}> : () -> ()
    %cst = arith.constant dense<0.000000e+00> : vector<1x8x32xf32>
    %6 = tpu.matmul %3, %4, %cst {dimension_numbers = #tpu.dot_dimension_numbers<[2], [1], [1], [2], [0, 0, 0, 1, 1, 2], [0], [0]>} : vector<1x8x8xf32>, vector<1x8x32xf32>, vector<1x8x32xf32> -> vector<1x8x32xf32>
    "tpu.trace_stop"() : () -> ()
    %7 = arith.addf %5, %6 : vector<1x8x32xf32>
    %c0_9 = arith.constant 0 : index
    %c0_10 = arith.constant 0 : index
    %c0_11 = arith.constant 0 : index
    %8 = vector.load %arg7[%c0_9, %c0_10, %c0_11] : memref<1x8x32xf32, #tpu.memory_space<vmem>>, vector<1x8x32xf32>
    tpu.vector_store %arg7[%c0_9, %c0_10, %c0_11], %7 {strides = array<i32>} : memref<1x8x32xf32, #tpu.memory_space<vmem>>, vector<1x8x32xf32>,
    %c0_i32_12 = arith.constant 0 : i32
    %9 = arith.cmpi eq, %arg3, %c0_i32_12 : i32
    %10 = arith.extui %9 : i1 to i32
    %c0_i32_13 = arith.constant 0 : i32
    %11 = arith.cmpi ne, %10, %c0_i32_13 : i32
    scf.if %11 {
      %c0_14 = arith.constant 0 : index
      %c0_15 = arith.constant 0 : index
      %c0_16 = arith.constant 0 : index
      %12 = vector.load %arg7[%c0_14, %c0_15, %c0_16] : memref<1x8x32xf32, #tpu.memory_space<vmem>>, vector<1x8x32xf32>
      %c0_17 = arith.constant 0 : index
      %c0_18 = arith.constant 0 : index
      %c0_19 = arith.constant 0 : index
      %13 = vector.load %arg6[%c0_17, %c0_18, %c0_19] : memref<1x8x32xf32, #tpu.memory_space<vmem>>, vector<1x8x32xf32>
      tpu.vector_store %arg6[%c0_17, %c0_18, %c0_19], %12 {strides = array<i32>} : memref<1x8x32xf32, #tpu.memory_space<vmem>>, vector<1x8x32xf32>,
    } else {
    }
    return
  }
  func.func @transform_0(%arg0: i32, %arg1: i32, %arg2: i32, %arg3: i32) -> (i32, i32, i32) {
    %c0_i32 = arith.constant 0 : i32
    return %arg0, %arg1, %arg3 : i32, i32, i32
  }
  func.func @transform_1(%arg0: i32, %arg1: i32, %arg2: i32, %arg3: i32) -> (i32, i32, i32) {
    %c0_i32 = arith.constant 0 : i32
    return %arg0, %arg3, %arg2 : i32, i32, i32
  }
  func.func @transform_2(%arg0: i32, %arg1: i32, %arg2: i32, %arg3: i32) -> (i32, i32, i32) {
    %c0_i32 = arith.constant 0 : i32
    return %arg0, %arg1, %arg2 : i32, i32, i32
  }
}

</mosaic_0001>

<llo_original>
// kernel: tpu_custom_call.1
$region0: #{tpu_custom_call.1}
  #allocation0 [shape = 'u32[]', space=smem, size = 0x4, offset = 0x4, fixed_abs, tag = 'smem constant byte address 0x4 - core index']
  #allocation1 [shape = 'u32[72,128]{1,0:T(1,128)}', space=vmem, size = 0x9000, scoped, tag = 'internal scratch']
  #allocation2 [shape = 'f32[1,8,32]{2,1,0:T(8,128)}', space=vmem, size = 0x1000, scoped, tag = 'scratch operand']
  %s0 = inlined_call_operand.hbm [shape: f32[2,8,8], index: 0, kind: input, shape index: {}]
  %s1 = inlined_call_operand.hbm [shape: f32[2,8,32], index: 1, kind: input, shape index: {}]
  %s2 = inlined_call_operand.hbm [shape: f32[2,8,32], index: 2, kind: output, shape index: {}]
  %s3 = sld [smem:[#allocation0]]
  $region57: #{tpu_custom_call.1} parent=0
    _
  %s5 = ssub.s32 1, %s3
  %s6 = scalar_select 0, %s5, %s3
  $region1: #{tpu_custom_call.1} parent=0
    #allocation3 [shape = 'u8[8192]{0}', space=vmem, size = 0x2000, scoped, tag = 'input window, operand 0']
    #allocation4 [shape = 's32[2]{0}', space=sflag, size = 0x8, scoped, tag = 'scoped memory for tpu_custom_call.1']
    #allocation5 [shape = 's32[2]{0}', space=sflag, size = 0x8, scoped, tag = 'scoped memory for tpu_custom_call.1']
    #allocation6 [shape = 'u8[8192]{0}', space=vmem, size = 0x2000, scoped, tag = 'input window, operand 1']
    #allocation7 [shape = 's32[2]{0}', space=sflag, size = 0x8, scoped, tag = 'scoped memory for tpu_custom_call.1']
    #allocation8 [shape = 'u8[8192]{0}', space=vmem, size = 0x2000, scoped, tag = 'output window, operand 0']
    %7 = vsyncpa [#allocation4], 0
    %s8 = scalar_lea.sflag [#allocation4], 1
    %9 = vsyncpa %s8, 0
    %10 = vsyncpa [#allocation7], 0
    %s11 = scalar_lea.sflag [#allocation7], 1
    %12 = vsyncpa %s11, 0
    %13 = vsyncpa [#allocation5], 0
    %s14 = scalar_lea.sflag [#allocation5], 1
    %15 = vsyncpa %s14, 0
    loop: start=0, step=1, limit=4
    $region2: #{tpu_custom_call.1} parent=1 // loop_pre_header
      _
    $region3: #{tpu_custom_call.1} parent=1 // loop_header
      %s17 = sphi 0, %s21
      %p18 = scmp.ge.s32.totalorder %s17, 4
      %s24 = sphi 0, %s50
      %s25 = sphi 0, %s46
      %s26 = sphi 0, %s42
      %s27 = sphi 0, %s38
      %s28 = sphi 0, %s24
      %s29 = sphi 0, %s25
      %s30 = sphi 0, %s26
      %s31 = sphi 0, %s27
      %s32 = sphi 0, %s28
      %s33 = sphi 0, %s29
      %s34 = sphi 0, %s30
      %s35 = sphi 0, %s31
      %s57 = sphi 0, %s59
      %s60 = sphi 0, %s57
      %s61 = sphi 0, %s60
      %s77 = sphi 0, %s61
      %s87 = sphi 0, %s89
      %s90 = sphi 0, %s87
      %s91 = sphi 0, %s90
      %s107 = sphi 0, %s91
      %s117 = sphi 0, %s119
      %s120 = sphi 0, %s117
      %s121 = sphi 0, %s120
      %s137 = sphi 0, %s121
    $region4: #{tpu_custom_call.1} parent=1 // loop_header_branch
      %20 = sbr.rel (%p18) target = $region8
    $region5: #{tpu_custom_call.1} parent=1 // loop_body
      %s22 = ssub.s32 %s17, 1
      %s23 = ssub.s32 %s17, 2
      %s36 = sadd.s32 1, %s27
      %p37 = scmp.ge.s32.totalorder %s36, 1
      %s38 = scalar_select %p37, 0, %s36
      %s39 = sadd.s32 1, %s26
      %s40 = scalar_select %p37, %s39, %s26
      %p41 = scmp.ge.s32.totalorder %s40, 1
      %s42 = scalar_select %p41, 0, %s40
      %s43 = sadd.s32 1, %s25
      %s44 = scalar_select %p41, %s43, %s25
      %p45 = scmp.ge.s32.totalorder %s44, 1
      %s46 = scalar_select %p45, 0, %s44
      %s47 = sadd.s32 1, %s24
      %s48 = scalar_select %p45, %s47, %s24
      %p49 = scmp.ge.s32.totalorder %s48, 2
      %s50 = scalar_select %p49, 0, %s48
      %s51 = ssub.s32 %s24, %s50
      %s52 = ssub.s32 %s25, %s46
      %s53 = sor.u32 %s51, %s52
      %s54 = ssub.s32 %s27, %s38
      %s55 = sor.u32 %s53, %s54
      %p56 = scmp.eq.s32.totalorder %s55, 0
      %s58 = sadd.s32 %s57, 1
      %s59 = scalar_select %p56, %s57, %s58
      %p62 = pneg %p56
      %p63 = scmp.eq.s32.totalorder %s17, 1
      %p64 = por %p62, %p63
      %p65 = scmp.ne.s32.totalorder %s57, %s60
      %p66 = scmp.eq.s32.totalorder %s17, 0
      %p67 = por %p65, %p66
      %p68 = scmp.ne.s32.totalorder %s57, %s60
      %p69 = scmp.eq.s32.totalorder %s22, 1
      %p70 = por %p68, %p69
      %p71 = scmp.ne.s32.totalorder %s60, %s61
      %p72 = scmp.eq.s32.totalorder %s22, 0
      %p73 = por %p71, %p72
      %p74 = scmp.ne.s32.totalorder %s60, %s61
      %p75 = scmp.eq.s32.totalorder %s23, 1
      %p76 = por %p74, %p75
      %p78 = scmp.ne.s32.totalorder %s61, %s77
      %p79 = scmp.eq.s32.totalorder %s23, 0
      %p80 = por %p78, %p79
      %s81 = ssub.s32 %s24, %s50
      %s82 = ssub.s32 %s27, %s38
      %s83 = sor.u32 %s81, %s82
      %s84 = ssub.s32 %s26, %s42
      %s85 = sor.u32 %s83, %s84
      %p86 = scmp.eq.s32.totalorder %s85, 0
      %s88 = sadd.s32 %s87, 1
      %s89 = scalar_select %p86, %s87, %s88
      %p92 = pneg %p86
      %p93 = scmp.eq.s32.totalorder %s17, 1
      %p94 = por %p92, %p93
      %p95 = scmp.ne.s32.totalorder %s87, %s90
      %p96 = scmp.eq.s32.totalorder %s17, 0
      %p97 = por %p95, %p96
      %p98 = scmp.ne.s32.totalorder %s87, %s90
      %p99 = scmp.eq.s32.totalorder %s22, 1
      %p100 = por %p98, %p99
      %p101 = scmp.ne.s32.totalorder %s90, %s91
      %p102 = scmp.eq.s32.totalorder %s22, 0
      %p103 = por %p101, %p102
      %p104 = scmp.ne.s32.totalorder %s90, %s91
      %p105 = scmp.eq.s32.totalorder %s23, 1
      %p106 = por %p104, %p105
      %p108 = scmp.ne.s32.totalorder %s91, %s107
      %p109 = scmp.eq.s32.totalorder %s23, 0
      %p110 = por %p108, %p109
      %s111 = ssub.s32 %s24, %s50
      %s112 = ssub.s32 %s25, %s46
      %s113 = sor.u32 %s111, %s112
      %s114 = ssub.s32 %s26, %s42
      %s115 = sor.u32 %s113, %s114
      %p116 = scmp.eq.s32.totalorder %s115, 0
      %s118 = sadd.s32 %s117, 1
      %s119 = scalar_select %p116, %s117, %s118
      %p122 = pneg %p116
      %p123 = scmp.eq.s32.totalorder %s17, 1
      %p124 = por %p122, %p123
      %p125 = scmp.ne.s32.totalorder %s117, %s120
      %p126 = scmp.eq.s32.totalorder %s17, 0
      %p127 = por %p125, %p126
      %p128 = scmp.ne.s32.totalorder %s117, %s120
      %p129 = scmp.eq.s32.totalorder %s22, 1
      %p130 = por %p128, %p129
      %p131 = scmp.ne.s32.totalorder %s120, %s121
      %p132 = scmp.eq.s32.totalorder %s22, 0
      %p133 = por %p131, %p132
      %p134 = scmp.ne.s32.totalorder %s120, %s121
      %p135 = scmp.eq.s32.totalorder %s23, 1
      %p136 = por %p134, %p135
      %p138 = scmp.ne.s32.totalorder %s121, %s137
      %p139 = scmp.eq.s32.totalorder %s23, 0
      %p140 = por %p138, %p139
      %p141 = scmp.le.s32.totalorder 1, %s17
      %p142 = scmp.lt.s32.totalorder %s17, 3
      %p143 = pnand %p141, %p142
      %p144 = pneg %p143
      // Predicated region
      $region9: #{tpu_custom_call.1} parent=5 // pred_check
        _
      $region10: #{tpu_custom_call.1} parent=5 // pred_check_branch
        %146 = sbr.rel (%p143) target = $region12
      $region11: #{tpu_custom_call.1} parent=5 // pred_region
        %s147 = ssub.s32 %s17, 1
      $region12: #{tpu_custom_call.1} parent=5 // pred_fallthru
        _
      %p148 = scmp.lt.s32.totalorder %s17, 2
      // Predicated region
      $region13: #{tpu_custom_call.1} parent=5 // pred_check
        %p149 = pneg %p148
      $region14: #{tpu_custom_call.1} parent=5 // pred_check_branch
        %151 = sbr.rel (%p149) target = $region16
      $region15: #{tpu_custom_call.1} parent=5 // pred_region
        // Predicated region
        $region17: #{tpu_custom_call.1} parent=15 // pred_check
          %p152 = pneg %p67
        $region18: #{tpu_custom_call.1} parent=15 // pred_check_branch
          %154 = sbr.rel (%p152) target = $region20
        $region19: #{tpu_custom_call.1} parent=15 // pred_region
          %s155 = sand.u32 %s57, 1
          %s156 = scalar_lea.sflag [#allocation4], %s155
          %s157 = sand.u32 %s57, 1
          %s158 = smul.addr %s157, 8
          %s159 = scalar_lea.vmem [#allocation3], %s158
          %161 = vsyncadd %s156, 0
          %s162 = sadd.s32 %s27, %s25
          %s163 = sadd.s32 %s162, %s24
          %s164 = smul.addr %s163, 8
          %s165 = scalar_lea.hbm %s0, %s164
          %s167 = sshll.u32 %s165, 4
          %s168 = int_to_ptr.hbm [resolvable:$true] %s167
          %s169 = sshll.u32 %s159, 4
          %s170 = int_to_ptr.vmem [resolvable:$true] %s169
          %172 = dma.hbm_to_vmem [thread:$0]  %s168, 128, %s170, %s156
        $region20: #{tpu_custom_call.1} parent=15 // pred_fallthru
          _
        // Predicated region
        $region21: #{tpu_custom_call.1} parent=15 // pred_check
          %p173 = pneg %p97
        $region22: #{tpu_custom_call.1} parent=15 // pred_check_branch
          %175 = sbr.rel (%p173) target = $region24
        $region23: #{tpu_custom_call.1} parent=15 // pred_region
          %s176 = sand.u32 %s87, 1
          %s177 = scalar_lea.sflag [#allocation7], %s176
          %s178 = sand.u32 %s87, 1
          %s179 = smul.addr %s178, 8
          %s180 = scalar_lea.vmem [#allocation6], %s179
          %182 = vsyncadd %s177, 0
          %s183 = sadd.s32 %s26, %s27
          %s184 = sadd.s32 %s183, %s24
          %s185 = smul.addr %s184, 8
          %s186 = scalar_lea.hbm %s1, %s185
          %s188 = sshll.u32 %s186, 4
          %s189 = int_to_ptr.hbm [resolvable:$true] %s188
          %s190 = sshll.u32 %s180, 4
          %s191 = int_to_ptr.vmem [resolvable:$true] %s190
          %193 = dma.hbm_to_vmem [thread:$0]  %s189, 128, %s191, %s177
        $region24: #{tpu_custom_call.1} parent=15 // pred_fallthru
          _
      $region16: #{tpu_custom_call.1} parent=5 // pred_fallthru
        _
      %p194 = scmp.le.s32.totalorder 1, %s17
      %p195 = scmp.lt.s32.totalorder %s17, 3
      %p196 = pnand %p194, %p195
      %p197 = pneg %p196
      // Predicated region
      $region25: #{tpu_custom_call.1} parent=5 // pred_check
        _
      $region26: #{tpu_custom_call.1} parent=5 // pred_check_branch
        %199 = sbr.rel (%p196) target = $region28
      $region27: #{tpu_custom_call.1} parent=5 // pred_region
        %s200 = ssub.s32 %s17, 1
        %s201 = sand.u32 %s60, 1
        %s202 = scalar_lea.sflag [#allocation4], %s201
        %s203 = sand.u32 %s60, 1
        %s204 = smul.addr %s203, 8
        %s205 = scalar_lea.vmem [#allocation3], %s204
        // Predicated region
        $region29: #{tpu_custom_call.1} parent=27 // pred_check
          %p206 = pneg %p73
        $region30: #{tpu_custom_call.1} parent=27 // pred_check_branch
          %208 = sbr.rel (%p206) target = $region32
        $region31: #{tpu_custom_call.1} parent=27 // pred_region
          %210 = dma.done %s202, 128
        $region32: #{tpu_custom_call.1} parent=27 // pred_fallthru
          _
        %s211 = sand.u32 %s90, 1
        %s212 = scalar_lea.sflag [#allocation7], %s211
        %s213 = sand.u32 %s90, 1
        %s214 = smul.addr %s213, 8
        %s215 = scalar_lea.vmem [#allocation6], %s214
        // Predicated region
        $region33: #{tpu_custom_call.1} parent=27 // pred_check
          %p216 = pneg %p103
        $region34: #{tpu_custom_call.1} parent=27 // pred_check_branch
          %218 = sbr.rel (%p216) target = $region36
        $region35: #{tpu_custom_call.1} parent=27 // pred_region
          %220 = dma.done %s212, 128
        $region36: #{tpu_custom_call.1} parent=27 // pred_fallthru
          _
        %s221 = sand.u32 %s60, 1
        %s222 = scalar_lea.sflag [#allocation4], %s221
        %s223 = sand.u32 %s60, 1
        %s224 = smul.addr %s223, 8
        %s225 = scalar_lea.vmem [#allocation3], %s224
        %p226 = pneg %p73
        %p227 = pneg %p70
        %s228 = sand.u32 %s90, 1
        %s229 = scalar_lea.sflag [#allocation7], %s228
        %s230 = sand.u32 %s90, 1
        %s231 = smul.addr %s230, 8
        %s232 = scalar_lea.vmem [#allocation6], %s231
        %p233 = pneg %p103
        %p234 = pneg %p100
        %p235 = pneg %p133
        %p236 = pneg %p130
        %s237 = sand.u32 %s120, 1
        %s238 = scalar_lea.sflag [#allocation5], %s237
        %s239 = sand.u32 %s120, 1
        %s240 = smul.addr %s239, 8
        %s241 = scalar_lea.vmem [#allocation8], %s240
        %p242 = scmp.eq.s32.totalorder %s31, 0
        // Predicated region
        $region37: #{tpu_custom_call.1} parent=27 // pred_check
          %p243 = pneg %p242
        $region38: #{tpu_custom_call.1} parent=27 // pred_check_branch
          %245 = sbr.rel (%p243) target = $region40
        $region39: #{tpu_custom_call.1} parent=27 // pred_region
          %vm246 = vcmask 261120
          %247 = vst.msk [vmem:[#allocation2] sm:$0xff] %vm246, 0.0
        $region40: #{tpu_custom_call.1} parent=27 // pred_fallthru
          _
        %v248 = vld [vmem:[%s205] sm:$0xff]
        %v249 = vld [vmem:[%s215] sm:$0xff]
        %v250 = vld [vmem:[#allocation2] sm:$0xff]
        %vm251 = vcmask 64512
        %v253 = vsel %vm251, %v248, 0
        %255 = vmatpush.msra.mxu0 0.0
        %256 = vmatpush.msra.mxu0 0.0
        %257 = vmatpush.msra.mxu0 0.0
        %258 = vmatpush.msra.mxu0 0.0
        %259 = vmatpush.msra.mxu0 0.0
        %260 = vmatpush.msra.mxu0 0.0
        %261 = vmatpush.msra.mxu0 0.0
        %262 = vmatpush.msra.mxu0 0.0
        %263 = vmatpush.msra.mxu0 0.0
        %264 = vmatpush.msra.mxu0 0.0
        %265 = vmatpush.msra.mxu0 0.0
        %266 = vmatpush.msra.mxu0 0.0
        %267 = vmatpush.msra.mxu0 0.0
        %268 = vmatpush.msra.mxu0 0.0
        %269 = vmatpush.msra.mxu0 0.0
        %270 = vmatpush.msra.mxu0 %v249
        %271 = vmatmul.f32.gmra.mxu0 %v253
        %v272 = vpop.f32.mrf.mxu0
        %v273 = vadd.f32 0.0, %v272
        %274 = vdwg.mxu0
        %v275 = vadd.f32 %v250, %v273
        %vm276 = vcmask 261120
        %277 = vst.msk [vmem:[#allocation2] sm:$0xff] %vm276, %v275
        // Predicated region
        $region41: #{tpu_custom_call.1} parent=27 // pred_check
          %p278 = pneg %p242
        $region42: #{tpu_custom_call.1} parent=27 // pred_check_branch
          %280 = sbr.rel (%p278) target = $region44
        $region43: #{tpu_custom_call.1} parent=27 // pred_region
          %v281 = vld [vmem:[#allocation2] sm:$0xff]
          %282 = vst.msk [vmem:[%s241] sm:$0xff] %vm276, %v281
        $region44: #{tpu_custom_call.1} parent=27 // pred_fallthru
          _
        %s283 = sand.u32 %s120, 1
        %s284 = scalar_lea.sflag [#allocation5], %s283
        %s285 = sand.u32 %s120, 1
        %s286 = smul.addr %s285, 8
        %s287 = scalar_lea.vmem [#allocation8], %s286
        // Predicated region
        $region45: #{tpu_custom_call.1} parent=27 // pred_check
          %p288 = pneg %p130
        $region46: #{tpu_custom_call.1} parent=27 // pred_check_branch
          %290 = sbr.rel (%p288) target = $region48
        $region47: #{tpu_custom_call.1} parent=27 // pred_region
          %292 = vsyncadd %s284, 0
          %s293 = sadd.s32 %s30, %s29
          %s294 = sadd.s32 %s293, %s28
          %s295 = smul.addr %s294, 8
          %s296 = scalar_lea.hbm %s2, %s295
          %s298 = sshll.u32 %s287, 4
          %s299 = int_to_ptr.vmem [resolvable:$true] %s298
          %s300 = sshll.u32 %s296, 4
          %s301 = int_to_ptr.hbm [resolvable:$true] %s300
          %303 = dma.vmem_to_hbm [thread:$0]  %s299, 128, %s301, %s284
        $region48: #{tpu_custom_call.1} parent=27 // pred_fallthru
          _
      $region28: #{tpu_custom_call.1} parent=5 // pred_fallthru
        _
      %p304 = scmp.le.s32.totalorder 2, %s17
      // Predicated region
      $region49: #{tpu_custom_call.1} parent=5 // pred_check
        %p305 = pneg %p304
      $region50: #{tpu_custom_call.1} parent=5 // pred_check_branch
        %307 = sbr.rel (%p305) target = $region52
      $region51: #{tpu_custom_call.1} parent=5 // pred_region
        %s308 = ssub.s32 %s17, 2
        // Predicated region
        $region53: #{tpu_custom_call.1} parent=51 // pred_check
          %p309 = pneg %p136
        $region54: #{tpu_custom_call.1} parent=51 // pred_check_branch
          %311 = sbr.rel (%p309) target = $region56
        $region55: #{tpu_custom_call.1} parent=51 // pred_region
          %s312 = sand.u32 %s121, 1
          %s313 = scalar_lea.sflag [#allocation5], %s312
          %s314 = sand.u32 %s121, 1
          %s315 = smul.addr %s314, 8
          %s316 = scalar_lea.vmem [#allocation8], %s315
          %318 = dma.done %s313, 128
        $region56: #{tpu_custom_call.1} parent=51 // pred_fallthru
          _
      $region52: #{tpu_custom_call.1} parent=5 // pred_fallthru
        _
    $region6: #{tpu_custom_call.1} parent=1 // loop_footer
      %s21 = sadd.s32 1, %s17
    $region7: #{tpu_custom_call.1} parent=1 // loop_footer_branch
      %16 = sbr.rel target = $region3
    $region8: #{tpu_custom_call.1} parent=1 // loop_exit
      _
    %319 = vsyncpa [#allocation4], 1
    %s320 = scalar_lea.sflag [#allocation4], 1
    %321 = vsyncpa %s320, 1
    %322 = vsyncpa [#allocation7], 1
    %s323 = scalar_lea.sflag [#allocation7], 1
    %324 = vsyncpa %s323, 1
    %325 = vsyncpa [#allocation5], 1
    %s326 = scalar_lea.sflag [#allocation5], 1
    %327 = vsyncpa %s326, 1

</llo_original>
